<compile_context>
chip_gen: v6e
topology: v6e:2x2x1
jax: 0.10.0
libtpu: 0.0.40
codegen_flags: <defaults>
</compile_context>

<pallas_src>
import jax
import jax.numpy as jnp
from jax.experimental import pallas as pl
from jax.experimental.pallas import tpu as pltpu


# ----------------------------------------------------------------- wrapper ---

def nonlocal_net_forward(y, x, params):
    """y, x: (B, C, H, W) float32 (NCHW, like torch). Returns (B, 2)."""
    B, C, H, W = x.shape
    assert H % 2 == 0 and W % 2 == 0, "MaxPool2d(2) path assumes even H, W"
    IC = params["w_theta"].shape[0]
    N = H * W
    Ns = (H // 2) * (W // 2)

    # ------------- trace-time layout plumbing & algebraic weight folds ------
    # y channel-major with batch folded into lanes, plus a ones-row that
    # carries the theta bias through the folded attention matmul.
    y_cm = y.transpose(1, 0, 2, 3).reshape(C, B * N)                          # (C, B*N)
    y_aug = jnp.concatenate([y_cm, jnp.ones((1, B * N), y.dtype)], axis=0)    # (C+1, B*N)

    # x expanded into its 4 MaxPool window offsets, grouped so each offset is
    # a contiguous B*Ns-wide lane group: column = k*(B*Ns) + b*Ns + m with
    # k = 2*h_off + w_off and m = h2*(W//2) + w2.
    x_win = (x.reshape(B, C, H // 2, 2, W // 2, 2)
              .transpose(1, 3, 5, 0, 2, 4)
              .reshape(C, 4 * B * Ns))                                        # (C, 4*B*Ns)

    # phi & g 1x1 convs merged into one weight/bias.
    w_pg = jnp.concatenate([params["w_phi"], params["w_g"]], axis=0)          # (2IC, C)
    b_pg = jnp.concatenate([params["b_phi"], params["b_g"]], axis=0).reshape(2 * IC, 1)

    # theta folded into the attention matmul: wth_aug = [w_theta^T ; b_theta]
    # pairs with the ones-row appended to y.
    wth_aug = jnp.concatenate([params["w_theta"].T,
                               params["b_theta"][None, :]], axis=0)           # (C+1, IC)

    # BatchNorm (running stats, eval semantics) folded into the W 1x1 conv,
    # and that conv folded straight into the fc head:
    #   out[o] = sum_{ic,n} wfc2[o,ic,n] * z[ic,n] + bfc2[o]
    s = params["bn_gamma"] * jax.lax.rsqrt(params["bn_var"] + 1e-5)           # (C,)
    w_W_bn = params["w_W"] * s[:, None]                                       # (C, IC)
    b_W_bn = (params["b_W"] - params["bn_mean"]) * s + params["bn_beta"]      # (C,)
    wfc3 = params["w_fc"].reshape(2, C, N)           # torch channel-major flatten order
    wfc2 = jnp.einsum("ocn,ci->oin", wfc3, w_W_bn)                            # (2, IC, N)
    bfc2 = (jnp.einsum("ocn,c->o", wfc3, b_W_bn) + params["b_fc"]).reshape(2, 1)

    # --------------------------------------------------------------- kernel -
    def kernel(y_ref, xw_ref, wpg_ref, bpg_ref, wth_ref, wfc2_ref, bfc2_ref,
               o_ref):
        bns = B * Ns
        # phi & g 1x1 convs for the whole batch in a single MXU pass.
        pg = jnp.dot(wpg_ref[...], xw_ref[...],
                     preferred_element_type=jnp.float32)                      # (2IC, 4*B*Ns)
        # In-register MaxPool2d(2): the 4 window-offset column groups are each
        # B*Ns lanes wide (full 128-lane vregs here) -> plain full-vreg maxima.
        pooled = jnp.maximum(
            jnp.maximum(pg[:, 0 * bns:1 * bns], pg[:, 1 * bns:2 * bns]),
            jnp.maximum(pg[:, 2 * bns:3 * bns], pg[:, 3 * bns:4 * bns]))
        # Per-channel bias added after the pool.  Valid only because the bias
        # is a per-channel CONSTANT (max commutes with a constant shift); do
        # not move this if the bias ever becomes per-position.
        pooled = pooled + bpg_ref[...]                                        # (2IC, B*Ns)

        y_all = y_ref[...]                                                    # (C+1, B*N)
        wth_k = wth_ref[...]                                                  # (C+1, IC)
        wfc2_k = wfc2_ref[...]                                                # (2, IC, N)

        for b in range(B):                                    # static unroll, B == 2
            phi_b = pooled[:IC, b * Ns:(b + 1) * Ns]                          # (IC, Ns)
            g_b = pooled[IC:, b * Ns:(b + 1) * Ns]                            # (IC, Ns)
            # theta fold: phi2_aug = [w_theta^T @ phi ; b_theta @ phi].  The
            # ones-row of y_aug picks up the bias row, so no separate add.
            phi2_aug = jnp.dot(wth_k, phi_b,
                               preferred_element_type=jnp.float32)            # (C+1, Ns)
            y_b = y_all[:, b * N:(b + 1) * N]                                 # (C+1, N)
            # Attention scores in transposed, lane-dense orientation:
            #   fT[m, n] = f[n, m]
            fT = jax.lax.dot_general(phi2_aug, y_b, (((0,), (0,)), ((), ())),
                                     preferred_element_type=jnp.float32)      # (Ns, N)
            # softmax over m == the sublane axis of fT.
            f_max = jnp.max(fT, axis=0, keepdims=True)                        # (1, N)
            p = jnp.exp(fT - f_max)                                           # (Ns, N)
            denom = jnp.sum(p, axis=0, keepdims=True)                         # (1, N)
            # approx reciprocal: ~1e-5 drift vs exact softmax, fine at 1e-3 tol.
            attnT = p * pl.reciprocal(denom, approx=True)                     # (Ns, N)
            # z = g @ attn^T : (IC, Ns) @ (Ns, N) -> (IC, N)
            z_b = jnp.dot(g_b, attnT, preferred_element_type=jnp.float32)
            # W 1x1 conv + BatchNorm + fc, all folded into wfc2/bfc2.
            red = jnp.sum(wfc2_k * z_b[None, :, :], axis=2)                   # (2, IC)
            red = jnp.sum(red, axis=1, keepdims=True)                         # (2, 1)
            o_ref[:, b:b + 1] = red + bfc2_ref[...]

    out = pl.pallas_call(
        kernel,
        out_shape=jax.ShapeDtypeStruct((2, B), jnp.float32),
        grid=(1,),   # whole batch in one step: ~0.7 MFLOP total, so per-step
                     # prologue/epilogue would dominate a B-sized grid.
        in_specs=[
            pl.BlockSpec((C + 1, B * N), lambda i: (0, 0)),      # y (aug, channel-major)
            pl.BlockSpec((C, 4 * B * Ns), lambda i: (0, 0)),     # x (window-expanded)
            pl.BlockSpec((2 * IC, C), lambda i: (0, 0)),         # w_phi|w_g merged
            pl.BlockSpec((2 * IC, 1), lambda i: (0, 0)),         # b_phi|b_g merged
            pl.BlockSpec((C + 1, IC), lambda i: (0, 0)),         # [w_theta^T ; b_theta]
            pl.BlockSpec((2, IC, N), lambda i: (0, 0, 0)),       # fc (W-conv+BN folded)
            pl.BlockSpec((2, 1), lambda i: (0, 0)),              # fc bias (folded)
        ],
        out_specs=pl.BlockSpec((2, B), lambda i: (0, 0)),
        compiler_params=pltpu.CompilerParams(
            dimension_semantics=("arbitrary",)),
    )(y_aug, x_win, w_pg, b_pg, wth_aug, wfc2, bfc2)
    return out.T                                                              # (B, 2)


# ----------------------------------------------------------- pure-JAX check --

def reference_forward(y, x, params):
    B, C, H, W = x.shape
    conv = lambda t, w, b: jnp.einsum("bchw,oc->bohw", t, w) + b[None, :, None, None]
    pool = lambda t: jnp.max(
        t.reshape(t.shape[0], t.shape[1], H // 2, 2, W // 2, 2), axis=(3, 5))

    g_x = pool(conv(x, params["w_g"], params["b_g"]))
    IC = g_x.shape[1]
    g_x = g_x.reshape(B, IC, -1).transpose(0, 2, 1)
    theta_y = conv(y, params["w_theta"], params["b_theta"]).reshape(B, IC, -1).transpose(0, 2, 1)
    phi_x = pool(conv(x, params["w_phi"], params["b_phi"])).reshape(B, IC, -1)
    f = jnp.einsum("bnk,bkm->bnm", theta_y, phi_x)
    attn = jax.nn.softmax(f, axis=-1)
    z = jnp.einsum("bnm,bmk->bnk", attn, g_x)
    z = z.transpose(0, 2, 1).reshape(B, IC, H, W)
    wz = conv(z, params["w_W"], params["b_W"])
    wz = ((wz - params["bn_mean"][None, :, None, None])
          * jax.lax.rsqrt(params["bn_var"][None, :, None, None] + 1e-5)
          * params["bn_gamma"][None, :, None, None]
          + params["bn_beta"][None, :, None, None])
    flat = wz.reshape(B, -1)
    return flat @ params["w_fc"].T + params["b_fc"]


# --------------------------------------------------------------------- main --

def make_params(key, C, IC, H, W):
    ks = jax.random.split(key, 10)
    scale = 0.1
    return {
        # torch-like shapes: conv weight (out_ch, in_ch), linear weight (out, in)
        "w_g": scale * jax.random.normal(ks[0], (IC, C), jnp.float32),
        "b_g": scale * jax.random.normal(ks[1], (IC,), jnp.float32),
        "w_theta": scale * jax.random.normal(ks[2], (IC, C), jnp.float32),
        "b_theta": scale * jax.random.normal(ks[3], (IC,), jnp.float32),
        "w_phi": scale * jax.random.normal(ks[4], (IC, C), jnp.float32),
        "b_phi": scale * jax.random.normal(ks[5], (IC,), jnp.float32),
        "w_W": scale * jax.random.normal(ks[6], (C, IC), jnp.float32),
        "b_W": scale * jax.random.normal(ks[7], (C,), jnp.float32),
        # nn.init.constant_(W[1].weight, 0) / constant_(W[1].bias, 0)
        "bn_gamma": jnp.zeros((C,), jnp.float32),
        "bn_beta": jnp.zeros((C,), jnp.float32),
        "bn_mean": jnp.zeros((C,), jnp.float32),
        "bn_var": jnp.ones((C,), jnp.float32),
        "w_fc": scale * jax.random.normal(ks[8], (2, C * H * W), jnp.float32),
        "b_fc": scale * jax.random.normal(ks[9], (2,), jnp.float32),
    }


if __name__ == "__main__":
    B, C, H, W = 2, 8, 16, 16          # C*H*W == 2048 as required by nn.Linear(2048, 2)
    IC = C // 2

    key = jax.random.PRNGKey(0)
    kx, ky, kp = jax.random.split(key, 3)
    x = jax.random.normal(kx, (B, C, H, W), jnp.float32)
    y = jax.random.normal(ky, (B, C, H, W), jnp.float32)
    params = make_params(kp, C, IC, H, W)

    fwd = jax.jit(nonlocal_net_forward)

    out = jax.block_until_ready(fwd(y, x, params))
    ref = reference_forward(y, x, params)
    assert out.shape == (B, 2)
    assert jnp.allclose(out, ref, atol=1e-3, rtol=1e-3)

    # Non-degenerate BatchNorm check: the module's zero-init BN weight makes
    # the real output collapse to the fc bias, so this second run exercises
    # the full fused pool/attention/BN/fc fold path non-trivially.  Tolerance
    # covers the approx-reciprocal softmax denominator (~1e-5-level drift).
    params_t = dict(params, bn_gamma=jnp.ones((C,), jnp.float32),
                    bn_beta=0.05 * jnp.ones((C,), jnp.float32))
    out_t = jax.block_until_ready(fwd(y, x, params_t))
    ref_t = reference_forward(y, x, params_t)
    assert jnp.allclose(out_t, ref_t, atol=1e-3, rtol=1e-3)

    print("KERNEL_OK")
</pallas_src>

<mosaic_0001>
module attributes {stable_mosaic.version = 11 : i64} {
  func.func @kernel(%arg0: i32, %arg1: memref<9x512xf32, #tpu.memory_space<vmem>>, %arg2: memref<8x512xf32, #tpu.memory_space<vmem>>, %arg3: memref<8x8xf32, #tpu.memory_space<vmem>>, %arg4: memref<8x1xf32, #tpu.memory_space<vmem>>, %arg5: memref<9x4xf32, #tpu.memory_space<vmem>>, %arg6: memref<2x4x256xf32, #tpu.memory_space<vmem>>, %arg7: memref<2x1xf32, #tpu.memory_space<vmem>>, %arg8: memref<2x2xf32, #tpu.memory_space<vmem>>) attributes {dimension_semantics = [#tpu.dimension_semantics<arbitrary>], iteration_bounds = array<i64: 1>, scalar_prefetch = 0 : i64, scratch_operands = 0 : i64, tpu.core_type = #tpu.core_type<tc>, window_params = [{pipeline_mode = #tpu.pipeline_mode<synchronous>, transform_indices = @transform_0, window_bounds = array<i64: 9, 512>}, {pipeline_mode = #tpu.pipeline_mode<synchronous>, transform_indices = @transform_1, window_bounds = array<i64: 8, 512>}, {pipeline_mode = #tpu.pipeline_mode<synchronous>, transform_indices = @transform_2, window_bounds = array<i64: 8, 8>}, {pipeline_mode = #tpu.pipeline_mode<synchronous>, transform_indices = @transform_3, window_bounds = array<i64: 8, 1>}, {pipeline_mode = #tpu.pipeline_mode<synchronous>, transform_indices = @transform_4, window_bounds = array<i64: 9, 4>}, {pipeline_mode = #tpu.pipeline_mode<synchronous>, transform_indices = @transform_5, window_bounds = array<i64: 2, 4, 256>}, {pipeline_mode = #tpu.pipeline_mode<synchronous>, transform_indices = @transform_6, window_bounds = array<i64: 2, 1>}, {pipeline_mode = #tpu.pipeline_mode<synchronous>, transform_indices = @transform_7, window_bounds = array<i64: 2, 2>}]} {
    %c0 = arith.constant 0 : index
    %c0_0 = arith.constant 0 : index
    %0 = vector.load %arg3[%c0, %c0_0] : memref<8x8xf32, #tpu.memory_space<vmem>>, vector<8x8xf32>
    %c0_1 = arith.constant 0 : index
    %c0_2 = arith.constant 0 : index
    %1 = vector.load %arg2[%c0_1, %c0_2] : memref<8x512xf32, #tpu.memory_space<vmem>>, vector<8x512xf32>
    %cst = arith.constant dense<0.000000e+00> : vector<8x512xf32>
    %2 = tpu.matmul %0, %1, %cst {dimension_numbers = #tpu.dot_dimension_numbers<[1], [0], [0], [1], [0, 0, 1, 1], [], []>} : vector<8x8xf32>, vector<8x512xf32>, vector<8x512xf32> -> vector<8x512xf32>
    %3 = vector.extract_strided_slice %2 {offsets = [0, 0], sizes = [8, 128], strides = [1, 1]} : vector<8x512xf32> to vector<8x128xf32>
    %4 = vector.extract_strided_slice %2 {offsets = [0, 128], sizes = [8, 128], strides = [1, 1]} : vector<8x512xf32> to vector<8x128xf32>
    %5 = arith.maximumf %3, %4 : vector<8x128xf32>
    %6 = vector.extract_strided_slice %2 {offsets = [0, 256], sizes = [8, 128], strides = [1, 1]} : vector<8x512xf32> to vector<8x128xf32>
    %7 = vector.extract_strided_slice %2 {offsets = [0, 384], sizes = [8, 128], strides = [1, 1]} : vector<8x512xf32> to vector<8x128xf32>
    %8 = arith.maximumf %6, %7 : vector<8x128xf32>
    %9 = arith.maximumf %5, %8 : vector<8x128xf32>
    %c0_3 = arith.constant 0 : index
    %c0_4 = arith.constant 0 : index
    %10 = vector.load %arg4[%c0_3, %c0_4] : memref<8x1xf32, #tpu.memory_space<vmem>>, vector<8x1xf32>
    %11 = vector.broadcast %10 : vector<8x1xf32> to vector<8x128xf32>
    %12 = arith.addf %9, %11 : vector<8x128xf32>
    %c0_5 = arith.constant 0 : index
    %c0_6 = arith.constant 0 : index
    %13 = vector.load %arg1[%c0_5, %c0_6] : memref<9x512xf32, #tpu.memory_space<vmem>>, vector<9x512xf32>
    %c0_7 = arith.constant 0 : index
    %c0_8 = arith.constant 0 : index
    %14 = vector.load %arg5[%c0_7, %c0_8] : memref<9x4xf32, #tpu.memory_space<vmem>>, vector<9x4xf32>
    %c0_9 = arith.constant 0 : index
    %c0_10 = arith.constant 0 : index
    %c0_11 = arith.constant 0 : index
    %15 = vector.load %arg6[%c0_9, %c0_10, %c0_11] : memref<2x4x256xf32, #tpu.memory_space<vmem>>, vector<2x4x256xf32>
    %16 = vector.extract_strided_slice %12 {offsets = [0, 0], sizes = [4, 64], strides = [1, 1]} : vector<8x128xf32> to vector<4x64xf32>
    %17 = vector.extract_strided_slice %12 {offsets = [4, 0], sizes = [4, 64], strides = [1, 1]} : vector<8x128xf32> to vector<4x64xf32>
    %cst_12 = arith.constant dense<0.000000e+00> : vector<9x64xf32>
    %18 = tpu.matmul %14, %16, %cst_12 {dimension_numbers = #tpu.dot_dimension_numbers<[1], [0], [0], [1], [0, 0, 1, 1], [], []>} : vector<9x4xf32>, vector<4x64xf32>, vector<9x64xf32> -> vector<9x64xf32>
    %19 = vector.extract_strided_slice %13 {offsets = [0, 0], sizes = [9, 256], strides = [1, 1]} : vector<9x512xf32> to vector<9x256xf32>
    %cst_13 = arith.constant dense<0.000000e+00> : vector<64x256xf32>
    %20 = tpu.matmul %18, %19, %cst_13 {dimension_numbers = #tpu.dot_dimension_numbers<[0], [0], [1], [1], [0, 1, 1, 1], [], []>} : vector<9x64xf32>, vector<9x256xf32>, vector<64x256xf32> -> vector<64x256xf32>
    %cst_14 = arith.constant dense<0xFF800000> : vector<256xf32>
    %21 = vector.multi_reduction <maximumf>, %20, %cst_14 [0] : vector<64x256xf32> to vector<256xf32>
    %22 = vector.shape_cast %21 : vector<256xf32> to vector<1x256xf32>
    %23 = vector.broadcast %22 : vector<1x256xf32> to vector<64x256xf32>
    %24 = arith.subf %20, %23 : vector<64x256xf32>
    %25 = math.exp %24 : vector<64x256xf32>
    %cst_15 = arith.constant dense<0.000000e+00> : vector<256xf32>
    %26 = vector.multi_reduction <add>, %25, %cst_15 [0] : vector<64x256xf32> to vector<256xf32>
    %27 = vector.shape_cast %26 : vector<256xf32> to vector<1x256xf32>
    %28 = tpu.reciprocal %27 {approx = true} : vector<1x256xf32> -> vector<1x256xf32>
    %29 = vector.broadcast %28 : vector<1x256xf32> to vector<64x256xf32>
    %30 = arith.mulf %25, %29 : vector<64x256xf32>
    %cst_16 = arith.constant dense<0.000000e+00> : vector<4x256xf32>
    %31 = tpu.matmul %17, %30, %cst_16 {dimension_numbers = #tpu.dot_dimension_numbers<[1], [0], [0], [1], [0, 0, 1, 1], [], []>} : vector<4x64xf32>, vector<64x256xf32>, vector<4x256xf32> -> vector<4x256xf32>
    %32 = vector.shape_cast %31 : vector<4x256xf32> to vector<1x4x256xf32>
    %33 = vector.broadcast %32 : vector<1x4x256xf32> to vector<2x4x256xf32>
    %34 = arith.mulf %15, %33 : vector<2x4x256xf32>
    %cst_17 = arith.constant dense<0.000000e+00> : vector<2x4xf32>
    %35 = vector.multi_reduction <add>, %34, %cst_17 [2] : vector<2x4x256xf32> to vector<2x4xf32>
    %cst_18 = arith.constant dense<0.000000e+00> : vector<2xf32>
    %36 = vector.multi_reduction <add>, %35, %cst_18 [1] : vector<2x4xf32> to vector<2xf32>
    %37 = vector.shape_cast %36 : vector<2xf32> to vector<2x1xf32>
    %c0_19 = arith.constant 0 : index
    %c0_20 = arith.constant 0 : index
    %38 = vector.load %arg7[%c0_19, %c0_20] : memref<2x1xf32, #tpu.memory_space<vmem>>, vector<2x1xf32>
    %39 = arith.addf %37, %38 : vector<2x1xf32>
    %c0_21 = arith.constant 0 : index
    %c0_22 = arith.constant 0 : index
    %40 = vector.load %arg8[%c0_21, %c0_22] : memref<2x2xf32, #tpu.memory_space<vmem>>, vector<2x1xf32>
    tpu.vector_store %arg8[%c0_21, %c0_22], %39 {strides = array<i32>} : memref<2x2xf32, #tpu.memory_space<vmem>>, vector<2x1xf32>,
    %41 = vector.extract_strided_slice %12 {offsets = [0, 64], sizes = [4, 64], strides = [1, 1]} : vector<8x128xf32> to vector<4x64xf32>
    %42 = vector.extract_strided_slice %12 {offsets = [4, 64], sizes = [4, 64], strides = [1, 1]} : vector<8x128xf32> to vector<4x64xf32>
    %cst_23 = arith.constant dense<0.000000e+00> : vector<9x64xf32>
    %43 = tpu.matmul %14, %41, %cst_23 {dimension_numbers = #tpu.dot_dimension_numbers<[1], [0], [0], [1], [0, 0, 1, 1], [], []>} : vector<9x4xf32>, vector<4x64xf32>, vector<9x64xf32> -> vector<9x64xf32>
    %44 = vector.extract_strided_slice %13 {offsets = [0, 256], sizes = [9, 256], strides = [1, 1]} : vector<9x512xf32> to vector<9x256xf32>
    %cst_24 = arith.constant dense<0.000000e+00> : vector<64x256xf32>
    %45 = tpu.matmul %43, %44, %cst_24 {dimension_numbers = #tpu.dot_dimension_numbers<[0], [0], [1], [1], [0, 1, 1, 1], [], []>} : vector<9x64xf32>, vector<9x256xf32>, vector<64x256xf32> -> vector<64x256xf32>
    %cst_25 = arith.constant dense<0xFF800000> : vector<256xf32>
    %46 = vector.multi_reduction <maximumf>, %45, %cst_25 [0] : vector<64x256xf32> to vector<256xf32>
    %47 = vector.shape_cast %46 : vector<256xf32> to vector<1x256xf32>
    %48 = vector.broadcast %47 : vector<1x256xf32> to vector<64x256xf32>
    %49 = arith.subf %45, %48 : vector<64x256xf32>
    %50 = math.exp %49 : vector<64x256xf32>
    %cst_26 = arith.constant dense<0.000000e+00> : vector<256xf32>
    %51 = vector.multi_reduction <add>, %50, %cst_26 [0] : vector<64x256xf32> to vector<256xf32>
    %52 = vector.shape_cast %51 : vector<256xf32> to vector<1x256xf32>
    %53 = tpu.reciprocal %52 {approx = true} : vector<1x256xf32> -> vector<1x256xf32>
    %54 = vector.broadcast %53 : vector<1x256xf32> to vector<64x256xf32>
    %55 = arith.mulf %50, %54 : vector<64x256xf32>
    %cst_27 = arith.constant dense<0.000000e+00> : vector<4x256xf32>
    %56 = tpu.matmul %42, %55, %cst_27 {dimension_numbers = #tpu.dot_dimension_numbers<[1], [0], [0], [1], [0, 0, 1, 1], [], []>} : vector<4x64xf32>, vector<64x256xf32>, vector<4x256xf32> -> vector<4x256xf32>
    %57 = vector.shape_cast %56 : vector<4x256xf32> to vector<1x4x256xf32>
    %58 = vector.broadcast %57 : vector<1x4x256xf32> to vector<2x4x256xf32>
    %59 = arith.mulf %15, %58 : vector<2x4x256xf32>
    %cst_28 = arith.constant dense<0.000000e+00> : vector<2x4xf32>
    %60 = vector.multi_reduction <add>, %59, %cst_28 [2] : vector<2x4x256xf32> to vector<2x4xf32>
    %cst_29 = arith.constant dense<0.000000e+00> : vector<2xf32>
    %61 = vector.multi_reduction <add>, %60, %cst_29 [1] : vector<2x4xf32> to vector<2xf32>
    %62 = vector.shape_cast %61 : vector<2xf32> to vector<2x1xf32>
    %c0_30 = arith.constant 0 : index
    %c0_31 = arith.constant 0 : index
    %63 = vector.load %arg7[%c0_30, %c0_31] : memref<2x1xf32, #tpu.memory_space<vmem>>, vector<2x1xf32>
    %64 = arith.addf %62, %63 : vector<2x1xf32>
    %c0_32 = arith.constant 0 : index
    %c1 = arith.constant 1 : index
    %65 = vector.load %arg8[%c0_32, %c1] : memref<2x2xf32, #tpu.memory_space<vmem>>, vector<2x1xf32>
    tpu.vector_store %arg8[%c0_32, %c1], %64 {strides = array<i32>} : memref<2x2xf32, #tpu.memory_space<vmem>>, vector<2x1xf32>,
    return
  }
  func.func @transform_0(%arg0: i32) -> (i32, i32) {
    %c0_i32 = arith.constant 0 : i32
    %c0_i32_0 = arith.constant 0 : i32
    %c0_i32_1 = arith.constant 0 : i32
    return %c0_i32, %c0_i32_0 : i32, i32
  }
  func.func @transform_1(%arg0: i32) -> (i32, i32) {
    %c0_i32 = arith.constant 0 : i32
    %c0_i32_0 = arith.constant 0 : i32
    %c0_i32_1 = arith.constant 0 : i32
    return %c0_i32, %c0_i32_0 : i32, i32
  }
  func.func @transform_2(%arg0: i32) -> (i32, i32) {
    %c0_i32 = arith.constant 0 : i32
    %c0_i32_0 = arith.constant 0 : i32
    %c0_i32_1 = arith.constant 0 : i32
    return %c0_i32, %c0_i32_0 : i32, i32
  }
  func.func @transform_3(%arg0: i32) -> (i32, i32) {
    %c0_i32 = arith.constant 0 : i32
    %c0_i32_0 = arith.constant 0 : i32
    %c0_i32_1 = arith.constant 0 : i32
    return %c0_i32, %c0_i32_0 : i32, i32
  }
  func.func @transform_4(%arg0: i32) -> (i32, i32) {
    %c0_i32 = arith.constant 0 : i32
    %c0_i32_0 = arith.constant 0 : i32
    %c0_i32_1 = arith.constant 0 : i32
    return %c0_i32, %c0_i32_0 : i32, i32
  }
  func.func @transform_5(%arg0: i32) -> (i32, i32, i32) {
    %c0_i32 = arith.constant 0 : i32
    %c0_i32_0 = arith.constant 0 : i32
    %c0_i32_1 = arith.constant 0 : i32
    %c0_i32_2 = arith.constant 0 : i32
    return %c0_i32, %c0_i32_0, %c0_i32_1 : i32, i32, i32
  }
  func.func @transform_6(%arg0: i32) -> (i32, i32) {
    %c0_i32 = arith.constant 0 : i32
    %c0_i32_0 = arith.constant 0 : i32
    %c0_i32_1 = arith.constant 0 : i32
    return %c0_i32, %c0_i32_0 : i32, i32
  }
  func.func @transform_7(%arg0: i32) -> (i32, i32) {
    %c0_i32 = arith.constant 0 : i32
    %c0_i32_0 = arith.constant 0 : i32
    %c0_i32_1 = arith.constant 0 : i32
    return %c0_i32, %c0_i32_0 : i32, i32
  }
}

</mosaic_0001>

<llo_original>
// kernel: nonlocal_net_forward.1
$region0: #{nonlocal_net_forward.1}
  #allocation0 [shape = 'u32[]', space=smem, size = 0x4, offset = 0x4, fixed_abs, tag = 'smem constant byte address 0x4 - core index']
  #allocation1 [shape = 'u32[144,128]{1,0:T(1,128)}', space=vmem, size = 0x12000, scoped, tag = 'internal scratch']
  %s0 = inlined_call_operand.vmem [shape: f32[9,512], index: 0, kind: input, shape index: {}]
  %s1 = inlined_call_operand.vmem [shape: f32[8,512], index: 1, kind: input, shape index: {}]
  %s2 = inlined_call_operand.vmem [shape: f32[8,8], index: 2, kind: input, shape index: {}]
  %s3 = inlined_call_operand.vmem [shape: f32[8,1], index: 3, kind: input, shape index: {}]
  %s4 = inlined_call_operand.vmem [shape: f32[9,4], index: 4, kind: input, shape index: {}]
  %s5 = inlined_call_operand.vmem [shape: f32[2,4,256], index: 5, kind: input, shape index: {}]
  %s6 = inlined_call_operand.vmem [shape: f32[2,1], index: 6, kind: input, shape index: {}]
  %s7 = inlined_call_operand.vmem [shape: f32[2,2], index: 7, kind: output, shape index: {}]
  %s8 = sld [smem:[#allocation0]]
  $region38: #{nonlocal_net_forward.1} parent=0
    _
  %s10 = ssub.s32 1, %s8
  %s11 = scalar_select 0, %s10, %s8
  // Predicated region
  $region2: #{nonlocal_net_forward.1} parent=0 // pred_check
    _
  $region3: #{nonlocal_net_forward.1} parent=0 // pred_check_branch
    %13 = sbr.rel (0) target = $region5
  $region4: #{nonlocal_net_forward.1} parent=0 // pred_region
    _
  $region5: #{nonlocal_net_forward.1} parent=0 // pred_fallthru
    _
  // Predicated region
  $region6: #{nonlocal_net_forward.1} parent=0 // pred_check
    _
  $region7: #{nonlocal_net_forward.1} parent=0 // pred_check_branch
    %15 = sbr.rel (0) target = $region9
  $region8: #{nonlocal_net_forward.1} parent=0 // pred_region
    _
  $region9: #{nonlocal_net_forward.1} parent=0 // pred_fallthru
    _
  // Predicated region
  $region10: #{nonlocal_net_forward.1} parent=0 // pred_check
    _
  $region11: #{nonlocal_net_forward.1} parent=0 // pred_check_branch
    %17 = sbr.rel (0) target = $region13
  $region12: #{nonlocal_net_forward.1} parent=0 // pred_region
    _
  $region13: #{nonlocal_net_forward.1} parent=0 // pred_fallthru
    _
  // Predicated region
  $region14: #{nonlocal_net_forward.1} parent=0 // pred_check
    _
  $region15: #{nonlocal_net_forward.1} parent=0 // pred_check_branch
    %19 = sbr.rel (0) target = $region17
  $region16: #{nonlocal_net_forward.1} parent=0 // pred_region
    _
  $region17: #{nonlocal_net_forward.1} parent=0 // pred_fallthru
    _
  // Predicated region
  $region18: #{nonlocal_net_forward.1} parent=0 // pred_check
    _
  $region19: #{nonlocal_net_forward.1} parent=0 // pred_check_branch
    %21 = sbr.rel (0) target = $region21
  $region20: #{nonlocal_net_forward.1} parent=0 // pred_region
    _
  $region21: #{nonlocal_net_forward.1} parent=0 // pred_fallthru
    _
  // Predicated region
  $region22: #{nonlocal_net_forward.1} parent=0 // pred_check
    _
  $region23: #{nonlocal_net_forward.1} parent=0 // pred_check_branch
    %23 = sbr.rel (0) target = $region25
  $region24: #{nonlocal_net_forward.1} parent=0 // pred_region
    _
  $region25: #{nonlocal_net_forward.1} parent=0 // pred_fallthru
    _
  // Predicated region
  $region26: #{nonlocal_net_forward.1} parent=0 // pred_check
    _
  $region27: #{nonlocal_net_forward.1} parent=0 // pred_check_branch
    %25 = sbr.rel (0) target = $region29
  $region28: #{nonlocal_net_forward.1} parent=0 // pred_region
    _
  $region29: #{nonlocal_net_forward.1} parent=0 // pred_fallthru
    _
  %v26 = vld [vmem:[%s2] sm:$0xff]
  %v27 = vld [vmem:[%s1] sm:$0xff]
  %v28 = vld [vmem:[%s1 + $0x8] sm:$0xff]
  %v29 = vld [vmem:[%s1 + $0x10] sm:$0xff]
  %v30 = vld [vmem:[%s1 + $0x18] sm:$0xff]
  %vm31 = vcmask 64512
  %v33 = vsel %vm31, %v26, 0
  %35 = vmatprep.subr.mxu0 0.0
  %36 = vmatpush1.msra.mxu0 0.0
  %37 = vmatprep.subr.mxu0 0.0
  %38 = vmatpush1.msra.mxu0 0.0
  %39 = vmatprep.subr.mxu0 0.0
  %40 = vmatpush1.msra.mxu0 0.0
  %41 = vmatprep.subr.mxu0 0.0
  %42 = vmatpush1.msra.mxu0 0.0
  %43 = vmatprep.subr.mxu0 0.0
  %44 = vmatpush1.msra.mxu0 0.0
  %45 = vmatprep.subr.mxu0 0.0
  %46 = vmatpush1.msra.mxu0 0.0
  %47 = vmatprep.subr.mxu0 0.0
  %48 = vmatpush1.msra.mxu0 0.0
  %49 = vmatprep.subr.mxu0 0.0
  %50 = vmatpush1.msra.mxu0 0.0
  %51 = vmatprep.subr.mxu0 0.0
  %52 = vmatpush1.msra.mxu0 0.0
  %53 = vmatprep.subr.mxu0 0.0
  %54 = vmatpush1.msra.mxu0 0.0
  %55 = vmatprep.subr.mxu0 0.0
  %56 = vmatpush1.msra.mxu0 0.0
  %57 = vmatprep.subr.mxu0 0.0
  %58 = vmatpush1.msra.mxu0 0.0
  %59 = vmatprep.subr.mxu0 0.0
  %60 = vmatpush1.msra.mxu0 0.0
  %61 = vmatprep.subr.mxu0 0.0
  %62 = vmatpush1.msra.mxu0 0.0
  %63 = vmatprep.subr.mxu0 0.0
  %64 = vmatpush1.msra.mxu0 0.0
  %65 = vmatprep.subr.mxu0 %v28
  %66 = vmatpush1.msra.mxu0 %v27
  %67 = vmatprep.subr.mxu0 0.0
  %68 = vmatpush2.msra.mxu0 0.0
  %69 = vmatprep.subr.mxu0 0.0
  %70 = vmatpush2.msra.mxu0 0.0
  %71 = vmatprep.subr.mxu0 0.0
  %72 = vmatpush2.msra.mxu0 0.0
  %73 = vmatprep.subr.mxu0 0.0
  %74 = vmatpush2.msra.mxu0 0.0
  %75 = vmatprep.subr.mxu0 0.0
  %76 = vmatpush2.msra.mxu0 0.0
  %77 = vmatprep.subr.mxu0 0.0
  %78 = vmatpush2.msra.mxu0 0.0
  %79 = vmatprep.subr.mxu0 0.0
  %80 = vmatpush2.msra.mxu0 0.0
  %81 = vmatprep.subr.mxu0 0.0
  %82 = vmatpush2.msra.mxu0 0.0
  %83 = vmatprep.subr.mxu0 0.0
  %84 = vmatpush2.msra.mxu0 0.0
  %85 = vmatprep.subr.mxu0 0.0
  %86 = vmatpush2.msra.mxu0 0.0
  %87 = vmatprep.subr.mxu0 0.0
  %88 = vmatpush2.msra.mxu0 0.0
  %89 = vmatprep.subr.mxu0 0.0
  %90 = vmatpush2.msra.mxu0 0.0
  %91 = vmatprep.subr.mxu0 0.0
  %92 = vmatpush2.msra.mxu0 0.0
  %93 = vmatprep.subr.mxu0 0.0
  %94 = vmatpush2.msra.mxu0 0.0
  %95 = vmatprep.subr.mxu0 0.0
  %96 = vmatpush2.msra.mxu0 0.0
  %97 = vmatprep.subr.mxu0 0.0
  %98 = vmatpush2.msra.mxu0 0.0
  %99 = vmatprep.mubr.f32.mxu0 0.0
  %100 = vmatmul.mubr.f32.gmra.mxu0 %v33
  %v101 = vpop.f32.mrf.mxu0
  %v102 = vadd.f32 0.0, %v101
  %v103 = vpop.f32.mrf.mxu0
  %v104 = vadd.f32 0.0, %v103
  %105 = vdwg.mxu0
  %106 = vmatprep.subr.mxu0 0.0
  %107 = vmatpush1.msra.mxu0 0.0
  %108 = vmatprep.subr.mxu0 0.0
  %109 = vmatpush1.msra.mxu0 0.0
  %110 = vmatprep.subr.mxu0 0.0
  %111 = vmatpush1.msra.mxu0 0.0
  %112 = vmatprep.subr.mxu0 0.0
  %113 = vmatpush1.msra.mxu0 0.0
  %114 = vmatprep.subr.mxu0 0.0
  %115 = vmatpush1.msra.mxu0 0.0
  %116 = vmatprep.subr.mxu0 0.0
  %117 = vmatpush1.msra.mxu0 0.0
  %118 = vmatprep.subr.mxu0 0.0
  %119 = vmatpush1.msra.mxu0 0.0
  %120 = vmatprep.subr.mxu0 0.0
  %121 = vmatpush1.msra.mxu0 0.0
  %122 = vmatprep.subr.mxu0 0.0
  %123 = vmatpush1.msra.mxu0 0.0
  %124 = vmatprep.subr.mxu0 0.0
  %125 = vmatpush1.msra.mxu0 0.0
  %126 = vmatprep.subr.mxu0 0.0
  %127 = vmatpush1.msra.mxu0 0.0
  %128 = vmatprep.subr.mxu0 0.0
  %129 = vmatpush1.msra.mxu0 0.0
  %130 = vmatprep.subr.mxu0 0.0
  %131 = vmatpush1.msra.mxu0 0.0
  %132 = vmatprep.subr.mxu0 0.0
  %133 = vmatpush1.msra.mxu0 0.0
  %134 = vmatprep.subr.mxu0 0.0
  %135 = vmatpush1.msra.mxu0 0.0
  %136 = vmatprep.subr.mxu0 %v30
  %137 = vmatpush1.msra.mxu0 %v29
  %138 = vmatprep.subr.mxu0 0.0
  %139 = vmatpush2.msra.mxu0 0.0
  %140 = vmatprep.subr.mxu0 0.0
  %141 = vmatpush2.msra.mxu0 0.0
  %142 = vmatprep.subr.mxu0 0.0
  %143 = vmatpush2.msra.mxu0 0.0
  %144 = vmatprep.subr.mxu0 0.0
  %145 = vmatpush2.msra.mxu0 0.0
  %146 = vmatprep.subr.mxu0 0.0
  %147 = vmatpush2.msra.mxu0 0.0
  %148 = vmatprep.subr.mxu0 0.0
  %149 = vmatpush2.msra.mxu0 0.0
  %150 = vmatprep.subr.mxu0 0.0
  %151 = vmatpush2.msra.mxu0 0.0
  %152 = vmatprep.subr.mxu0 0.0
  %153 = vmatpush2.msra.mxu0 0.0
  %154 = vmatprep.subr.mxu0 0.0
  %155 = vmatpush2.msra.mxu0 0.0
  %156 = vmatprep.subr.mxu0 0.0
  %157 = vmatpush2.msra.mxu0 0.0
  %158 = vmatprep.subr.mxu0 0.0
  %159 = vmatpush2.msra.mxu0 0.0
  %160 = vmatprep.subr.mxu0 0.0
  %161 = vmatpush2.msra.mxu0 0.0
  %162 = vmatprep.subr.mxu0 0.0
  %163 = vmatpush2.msra.mxu0 0.0
  %164 = vmatprep.subr.mxu0 0.0
  %165 = vmatpush2.msra.mxu0 0.0
  %166 = vmatprep.subr.mxu0 0.0
  %167 = vmatpush2.msra.mxu0 0.0
  %168 = vmatprep.subr.mxu0 0.0
  %169 = vmatpush2.msra.mxu0 0.0
  %170 = vmatprep.mubr.f32.mxu0 0.0
  %171 = vmatmul.mubr.f32.gmra.mxu0 %v33
  %v172 = vpop.f32.mrf.mxu0
  %v173 = vadd.f32 0.0, %v172
  %v174 = vpop.f32.mrf.mxu0
  %v175 = vadd.f32 0.0, %v174
  %176 = vdwg.mxu0
  %v177 = vmax.f32 %v102, %v104
  %v178 = vmax.f32 %v173, %v175
  %v179 = vmax.f32 %v177, %v178
  %v180 = vld [vmem:[%s3] sm:$0xff]
  %182 = vset.pattern.permute.xlu0 0
  %183 = vperm.xlu0 %182, %v180
  %v184 = vpop.permute.xlu0 %183
  %v186 = vadd.f32 %v179, %v184
  %v187 = vld [vmem:[%s0] sm:$0xff]
  %v188 = vld [vmem:[%s0 + $0x8] sm:$0xff]
  %v189 = vld [vmem:[%s0 + $0x10] sm:$0xff]
  %v190 = vld [vmem:[%s0 + $0x18] sm:$0xff]
  %v191 = vld [vmem:[%s0 + $0x20] sm:$0x1]
  %v192 = vld [vmem:[%s0 + $0x28] sm:$0x1]
  %v193 = vld [vmem:[%s0 + $0x30] sm:$0x1]
  %v194 = vld [vmem:[%s0 + $0x38] sm:$0x1]
  %v195 = vld [vmem:[%s4] sm:$0xff]
  %v196 = vld [vmem:[%s4 + $0x8] sm:$0x1]
  %v197 = vld [vmem:[%s5] sm:$0xff]
  %v198 = vld [vmem:[%s5 + $0x8] sm:$0xff]
  %vm199 = vcmask 31744
  %v201 = vsel %vm199, %v195, 0
  %v204 = vsel %vm199, %v196, 0
  %vm206 = vcmask 1043456
  %v208 = vsel %vm206, %v186, 0
  %210 = vmatprep.subr.mxu0 0.0
  %211 = vmatpush1.msra.mxu0 0.0
  %212 = vmatprep.subr.mxu0 0.0
  %213 = vmatpush1.msra.mxu0 0.0
  %214 = vmatprep.subr.mxu0 0.0
  %215 = vmatpush1.msra.mxu0 0.0
  %216 = vmatprep.subr.mxu0 0.0
  %217 = vmatpush1.msra.mxu0 0.0
  %218 = vmatprep.subr.mxu0 0.0
  %219 = vmatpush1.msra.mxu0 0.0
  %220 = vmatprep.subr.mxu0 0.0
  %221 = vmatpush1.msra.mxu0 0.0
  %222 = vmatprep.subr.mxu0 0.0
  %223 = vmatpush1.msra.mxu0 0.0
  %224 = vmatprep.subr.mxu0 0.0
  %225 = vmatpush1.msra.mxu0 0.0
  %226 = vmatprep.subr.mxu0 0.0
  %227 = vmatpush1.msra.mxu0 0.0
  %228 = vmatprep.subr.mxu0 0.0
  %229 = vmatpush1.msra.mxu0 0.0
  %230 = vmatprep.subr.mxu0 0.0
  %231 = vmatpush1.msra.mxu0 0.0
  %232 = vmatprep.subr.mxu0 0.0
  %233 = vmatpush1.msra.mxu0 0.0
  %234 = vmatprep.subr.mxu0 0.0
  %235 = vmatpush1.msra.mxu0 0.0
  %236 = vmatprep.subr.mxu0 0.0
  %237 = vmatpush1.msra.mxu0 0.0
  %238 = vmatprep.subr.mxu0 0.0
  %239 = vmatpush1.msra.mxu0 0.0
  %240 = vmatprep.subr.mxu0 0.0
  %241 = vmatpush1.msra.mxu0 %v208
  %242 = vmatprep.subr.mxu0 0.0
  %243 = vmatpush2.msra.mxu0 0.0
  %244 = vmatprep.subr.mxu0 0.0
  %245 = vmatpush2.msra.mxu0 0.0
  %246 = vmatprep.subr.mxu0 0.0
  %247 = vmatpush2.msra.mxu0 0.0
  %248 = vmatprep.subr.mxu0 0.0
  %249 = vmatpush2.msra.mxu0 0.0
  %250 = vmatprep.subr.mxu0 0.0
  %251 = vmatpush2.msra.mxu0 0.0
  %252 = vmatprep.subr.mxu0 0.0
  %253 = vmatpush2.msra.mxu0 0.0
  %254 = vmatprep.subr.mxu0 0.0
  %255 = vmatpush2.msra.mxu0 0.0
  %256 = vmatprep.subr.mxu0 0.0
  %257 = vmatpush2.msra.mxu0 0.0
  %258 = vmatprep.subr.mxu0 0.0
  %259 = vmatpush2.msra.mxu0 0.0
  %260 = vmatprep.subr.mxu0 0.0
  %261 = vmatpush2.msra.mxu0 0.0
  %262 = vmatprep.subr.mxu0 0.0
  %263 = vmatpush2.msra.mxu0 0.0
  %264 = vmatprep.subr.mxu0 0.0
  %265 = vmatpush2.msra.mxu0 0.0
  %266 = vmatprep.subr.mxu0 0.0
  %267 = vmatpush2.msra.mxu0 0.0
  %268 = vmatprep.subr.mxu0 0.0
  %269 = vmatpush2.msra.mxu0 0.0
  %270 = vmatprep.subr.mxu0 0.0
  %271 = vmatpush2.msra.mxu0 0.0
  %272 = vmatprep.subr.mxu0 0.0
  %273 = vmatpush2.msra.mxu0 0.0
  %274 = vmatprep.mubr.f32.mxu0 0.0
  %275 = vmatmul.mubr.f32.gmra.mxu0 %v201
  %v276 = vpop.f32.mrf.mxu0
  %v277 = vadd.f32 0.0, %v276
  %v278 = vpop.f32.mrf.mxu0
  %279 = vmatprep.mubr.f32.mxu0 0.0
  %280 = vmatmul.mubr.f32.gmra.mxu0 %v204
  %v281 = vpop.f32.mrf.mxu0
  %v282 = vadd.f32 0.0, %v281
  %v283 = vpop.f32.mrf.mxu0
  %284 = vdwg.mxu0
  %285 = vxpose.xlu0.b32.start [1/16] %v277, 128
  %286 = vxpose.xlu0.b32.cont [2/16] %v282, 128
  %287 = vxpose.xlu0.b32.cont [3/16] 0.0, 128
  %288 = vxpose.xlu0.b32.cont [4/16] 0.0, 128
  %289 = vxpose.xlu0.b32.cont [5/16] 0.0, 128
  %290 = vxpose.xlu0.b32.cont [6/16] 0.0, 128
  %291 = vxpose.xlu0.b32.cont [7/16] 0.0, 128
  %292 = vxpose.xlu0.b32.cont [8/16] 0.0, 128
  %293 = vxpose.xlu0.b32.cont [9/16] 0.0, 128
  %294 = vxpose.xlu0.b32.cont [10/16] 0.0, 128
  %295 = vxpose.xlu0.b32.cont [11/16] 0.0, 128
  %296 = vxpose.xlu0.b32.cont [12/16] 0.0, 128
  %297 = vxpose.xlu0.b32.cont [13/16] 0.0, 128
  %298 = vxpose.xlu0.b32.cont [14/16] 0.0, 128
  %299 = vxpose.xlu0.b32.cont [15/16] 0.0, 128
  %300 = vxpose.xlu0.b32.end [16/16] 0.0, 128
  %v301 = vpop.trf.xlu0
  %v302 = vpop.trf.xlu0
  %v303 = vpop.trf.xlu0
  %v304 = vpop.trf.xlu0
  %v305 = vpop.trf.xlu0
  %v306 = vpop.trf.xlu0
  %v307 = vpop.trf.xlu0
  %v308 = vpop.trf.xlu0
  %v309 = vpop.trf.xlu0
  %v310 = vpop.trf.xlu0
  %v311 = vpop.trf.xlu0
  %v312 = vpop.trf.xlu0
  %v313 = vpop.trf.xlu0
  %v314 = vpop.trf.xlu0
  %v315 = vpop.trf.xlu0
  %v316 = vpop.trf.xlu0
  %vm317 = vcmask 72704
  %v319 = vsel %vm317, %v301, 0
  %v322 = vsel %vm317, %v302, 0
  %v325 = vsel %vm317, %v303, 0
  %v328 = vsel %vm317, %v304, 0
  %v331 = vsel %vm317, %v305, 0
  %v334 = vsel %vm317, %v306, 0
  %v337 = vsel %vm317, %v307, 0
  %v340 = vsel %vm317, %v308, 0
  %vm342 = vcmask 1040384
  %v344 = vsel %vm342, %v191, 0
  %v347 = vsel %vm342, %v192, 0
  %349 = vmatprep.subr.mxu0 0.0
  %350 = vmatpush1.msra.mxu0 0.0
  %351 = vmatprep.subr.mxu0 0.0
  %352 = vmatpush1.msra.mxu0 0.0
  %353 = vmatprep.subr.mxu0 0.0
  %354 = vmatpush1.msra.mxu0 0.0
  %355 = vmatprep.subr.mxu0 0.0
  %356 = vmatpush1.msra.mxu0 0.0
  %357 = vmatprep.subr.mxu0 0.0
  %358 = vmatpush1.msra.mxu0 0.0
  %359 = vmatprep.subr.mxu0 0.0
  %360 = vmatpush1.msra.mxu0 0.0
  %361 = vmatprep.subr.mxu0 0.0
  %362 = vmatpush1.msra.mxu0 0.0
  %363 = vmatprep.subr.mxu0 0.0
  %364 = vmatpush1.msra.mxu0 0.0
  %365 = vmatprep.subr.mxu0 0.0
  %366 = vmatpush1.msra.mxu0 0.0
  %367 = vmatprep.subr.mxu0 0.0
  %368 = vmatpush1.msra.mxu0 0.0
  %369 = vmatprep.subr.mxu0 0.0
  %370 = vmatpush1.msra.mxu0 0.0
  %371 = vmatprep.subr.mxu0 0.0
  %372 = vmatpush1.msra.mxu0 0.0
  %373 = vmatprep.subr.mxu0 0.0
  %374 = vmatpush1.msra.mxu0 0.0
  %375 = vmatprep.subr.mxu0 0.0
  %376 = vmatpush1.msra.mxu0 0.0
  %377 = vmatprep.subr.mxu0 %v347
  %378 = vmatpush1.msra.mxu0 %v344
  %379 = vmatprep.subr.mxu0 %v188
  %380 = vmatpush1.msra.mxu0 %v187
  %381 = vmatprep.subr.mxu0 0.0
  %382 = vmatpush2.msra.mxu0 0.0
  %383 = vmatprep.subr.mxu0 0.0
  %384 = vmatpush2.msra.mxu0 0.0
  %385 = vmatprep.subr.mxu0 0.0
  %386 = vmatpush2.msra.mxu0 0.0
  %387 = vmatprep.subr.mxu0 0.0
  %388 = vmatpush2.msra.mxu0 0.0
  %389 = vmatprep.subr.mxu0 0.0
  %390 = vmatpush2.msra.mxu0 0.0
  %391 = vmatprep.subr.mxu0 0.0
  %392 = vmatpush2.msra.mxu0 0.0
  %393 = vmatprep.subr.mxu0 0.0
  %394 = vmatpush2.msra.mxu0 0.0
  %395 = vmatprep.subr.mxu0 0.0
  %396 = vmatpush2.msra.mxu0 0.0
  %397 = vmatprep.subr.mxu0 0.0
  %398 = vmatpush2.msra.mxu0 0.0
  %399 = vmatprep.subr.mxu0 0.0
  %400 = vmatpush2.msra.mxu0 0.0
  %401 = vmatprep.subr.mxu0 0.0
  %402 = vmatpush2.msra.mxu0 0.0
  %403 = vmatprep.subr.mxu0 0.0
  %404 = vmatpush2.msra.mxu0 0.0
  %405 = vmatprep.subr.mxu0 0.0
  %406 = vmatpush2.msra.mxu0 0.0
  %407 = vmatprep.subr.mxu0 0.0
  %408 = vmatpush2.msra.mxu0 0.0
  %409 = vmatprep.subr.mxu0 0.0
  %410 = vmatpush2.msra.mxu0 0.0
  %411 = vmatprep.subr.mxu0 0.0
  %412 = vmatpush2.msra.mxu0 0.0
  %413 = vmatprep.mubr.f32.mxu0 0.0
  %414 = vmatmul.mubr.f32.gmra.mxu0 %v319
  %v415 = vpop.f32.mrf.mxu0
  %v416 = vadd.f32 0.0, %v415
  %v417 = vpop.f32.mrf.mxu0
  %v418 = vadd.f32 0.0, %v417
  %419 = vmatprep.mubr.f32.mxu0 0.0
  %420 = vmatmul.mubr.f32.gmra.mxu0 %v322
  %v421 = vpop.f32.mrf.mxu0
  %v422 = vadd.f32 0.0, %v421
  %v423 = vpop.f32.mrf.mxu0
  %v424 = vadd.f32 0.0, %v423
  %425 = vmatprep.mubr.f32.mxu0 0.0
  %426 = vmatmul.mubr.f32.gmra.mxu0 %v325
  %v427 = vpop.f32.mrf.mxu0
  %v428 = vadd.f32 0.0, %v427
  %v429 = vpop.f32.mrf.mxu0
  %v430 = vadd.f32 0.0, %v429
  %431 = vmatprep.mubr.f32.mxu0 0.0
  %432 = vmatmul.mubr.f32.gmra.mxu0 %v328
  %v433 = vpop.f32.mrf.mxu0
  %v434 = vadd.f32 0.0, %v433
  %v435 = vpop.f32.mrf.mxu0
  %v436 = vadd.f32 0.0, %v435
  %437 = vmatprep.mubr.f32.mxu0 0.0
  %438 = vmatmul.mubr.f32.gmra.mxu0 %v331
  %v439 = vpop.f32.mrf.mxu0
  %v440 = vadd.f32 0.0, %v439
  %v441 = vpop.f32.mrf.mxu0
  %v442 = vadd.f32 0.0, %v441
  %443 = vmatprep.mubr.f32.mxu0 0.0
  %444 = vmatmul.mubr.f32.gmra.mxu0 %v334
  %v445 = vpop.f32.mrf.mxu0
  %v446 = vadd.f32 0.0, %v445
  %v447 = vpop.f32.mrf.mxu0
  %v448 = vadd.f32 0.0, %v447
  %449 = vmatprep.mubr.f32.mxu0 0.0
  %450 = vmatmul.mubr.f32.gmra.mxu0 %v337
  %v451 = vpop.f32.mrf.mxu0
  %v452 = vadd.f32 0.0, %v451
  %v453 = vpop.f32.mrf.mxu0
  %v454 = vadd.f32 0.0, %v453
  %455 = vmatprep.mubr.f32.mxu0 0.0
  %456 = vmatmul.mubr.f32.gmra.mxu0 %v340
  %v457 = vpop.f32.mrf.mxu0
  %v458 = vadd.f32 0.0, %v457
  %v459 = vpop.f32.mrf.mxu0
  %v460 = vadd.f32 0.0, %v459
  %461 = vdwg.mxu0
  %v462 = vmax.f32 %v416, %v428
  %v463 = vmax.f32 %v422, %v434
  %v464 = vmax.f32 %v462, %v440
  %v465 = vmax.f32 %v463, %v446
  %v466 = vmax.f32 %v464, %v452
  %v467 = vmax.f32 %v465, %v458
  %v468 = vmax.f32 %v466, %v467
  %v469 = vrot.slane %v468, 4
  %v470 = vmax.f32 %v468, %v469
  %v471 = vrot.slane %v470, 2
  %v472 = vmax.f32 %v470, %v471
  %v473 = vrot.slane %v472, 1
  %v474 = vmax.f32 %v472, %v473
  %v475 = vmax.f32 %v418, %v430
  %v476 = vmax.f32 %v424, %v436
  %v477 = vmax.f32 %v475, %v442
  %v478 = vmax.f32 %v476, %v448
  %v479 = vmax.f32 %v477, %v454
  %v480 = vmax.f32 %v478, %v460
  %v481 = vmax.f32 %v479, %v480
  %v482 = vrot.slane %v481, 4
  %v483 = vmax.f32 %v481, %v482
  %v484 = vrot.slane %v483, 2
  %v485 = vmax.f32 %v483, %v484
  %v486 = vrot.slane %v485, 1
  %v487 = vmax.f32 %v485, %v486
  %v488 = vsub.f32 %v416, %v474
  %v489 = vsub.f32 %v418, %v487
  %v490 = vsub.f32 %v422, %v474
  %v491 = vsub.f32 %v424, %v487
  %v492 = vsub.f32 %v428, %v474
  %v493 = vsub.f32 %v430, %v487
  %v494 = vsub.f32 %v434, %v474
  %v495 = vsub.f32 %v436, %v487
  %v496 = vsub.f32 %v440, %v474
  %v497 = vsub.f32 %v442, %v487
  %v498 = vsub.f32 %v446, %v474
  %v499 = vsub.f32 %v448, %v487
  %v500 = vsub.f32 %v452, %v474
  %v501 = vsub.f32 %v454, %v487
  %v502 = vsub.f32 %v458, %v474
  %v503 = vsub.f32 %v460, %v487
  %v504 = vmul.f32 %v488, 1.442695
  %v505 = vpow.pop %v504
  %v506 = vmul.f32 %v489, 1.442695
  %v507 = vpow.pop %v506
  %v508 = vmul.f32 %v490, 1.442695
  %v509 = vpow.pop %v508
  %v510 = vmul.f32 %v491, 1.442695
  %v511 = vpow.pop %v510
  %v512 = vmul.f32 %v492, 1.442695
  %v513 = vpow.pop %v512
  %v514 = vmul.f32 %v493, 1.442695
  %v515 = vpow.pop %v514
  %v516 = vmul.f32 %v494, 1.442695
  %v517 = vpow.pop %v516
  %v518 = vmul.f32 %v495, 1.442695
  %v519 = vpow.pop %v518
  %v520 = vmul.f32 %v496, 1.442695
  %v521 = vpow.pop %v520
  %v522 = vmul.f32 %v497, 1.442695
  %v523 = vpow.pop %v522
  %v524 = vmul.f32 %v498, 1.442695
  %v525 = vpow.pop %v524
  %v526 = vmul.f32 %v499, 1.442695
  %v527 = vpow.pop %v526
  %v528 = vmul.f32 %v500, 1.442695
  %v529 = vpow.pop %v528
  %v530 = vmul.f32 %v501, 1.442695
  %v531 = vpow.pop %v530
  %v532 = vmul.f32 %v502, 1.442695
  %v533 = vpow.pop %v532
  %v534 = vmul.f32 %v503, 1.442695
  %v535 = vpow.pop %v534
  %v536 = vadd.f32 %v505, %v509
  %v537 = vadd.f32 %v536, %v513
  %v538 = vadd.f32 %v537, %v517
  %v539 = vadd.f32 %v538, %v521
  %v540 = vadd.f32 %v539, %v525
  %v541 = vadd.f32 %v540, %v529
  %v542 = vadd.f32 %v541, %v533
  %v543 = vrot.slane %v542, 4
  %v544 = vadd.f32 %v542, %v543
  %v545 = vrot.slane %v544, 2
  %v546 = vadd.f32 %v544, %v545
  %v547 = vrot.slane %v546, 1
  %v548 = vadd.f32 %v546, %v547
  %v549 = vadd.f32 %v507, %v511
  %v550 = vadd.f32 %v549, %v515
  %v551 = vadd.f32 %v550, %v519
  %v552 = vadd.f32 %v551, %v523
  %v553 = vadd.f32 %v552, %v527
  %v554 = vadd.f32 %v553, %v531
  %v555 = vadd.f32 %v554, %v535
  %v556 = vrot.slane %v555, 4
  %v557 = vadd.f32 %v555, %v556
  %v558 = vrot.slane %v557, 2
  %v559 = vadd.f32 %v557, %v558
  %v560 = vrot.slane %v559, 1
  %v561 = vadd.f32 %v559, %v560
  %v562 = vrcp.pop %v548
  %v563 = vrcp.pop %v561
  %v564 = vmul.f32 %v505, %v562
  %v565 = vmul.f32 %v507, %v563
  %v566 = vmul.f32 %v509, %v562
  %v567 = vmul.f32 %v511, %v563
  %v568 = vmul.f32 %v513, %v562
  %v569 = vmul.f32 %v515, %v563
  %v570 = vmul.f32 %v517, %v562
  %v571 = vmul.f32 %v519, %v563
  %v572 = vmul.f32 %v521, %v562
  %v573 = vmul.f32 %v523, %v563
  %v574 = vmul.f32 %v525, %v562
  %v575 = vmul.f32 %v527, %v563
  %v576 = vmul.f32 %v529, %v562
  %v577 = vmul.f32 %v531, %v563
  %v578 = vmul.f32 %v533, %v562
  %v579 = vmul.f32 %v535, %v563
  %v580 = vrot.slane %v186, 4
  %vm581 = vcmask 523264
  %v582 = vsel %vm581, %v580, 0
  %584 = vmatprep.subr.mxu0 0.0
  %585 = vmatpush1.msra.mxu0 0.0
  %586 = vmatprep.subr.mxu0 0.0
  %587 = vmatpush1.msra.mxu0 0.0
  %588 = vmatprep.subr.mxu0 0.0
  %589 = vmatpush1.msra.mxu0 0.0
  %590 = vmatprep.subr.mxu0 0.0
  %591 = vmatpush1.msra.mxu0 0.0
  %592 = vmatprep.subr.mxu0 0.0
  %593 = vmatpush1.msra.mxu0 0.0
  %594 = vmatprep.subr.mxu0 0.0
  %595 = vmatpush1.msra.mxu0 0.0
  %596 = vmatprep.subr.mxu0 0.0
  %597 = vmatpush1.msra.mxu0 0.0
  %598 = vmatprep.subr.mxu0 0.0
  %599 = vmatpush1.msra.mxu0 0.0
  %600 = vmatprep.subr.mxu0 %v579
  %601 = vmatpush1.msra.mxu0 %v578
  %602 = vmatprep.subr.mxu0 %v577
  %603 = vmatpush1.msra.mxu0 %v576
  %604 = vmatprep.subr.mxu0 %v575
  %605 = vmatpush1.msra.mxu0 %v574
  %606 = vmatprep.subr.mxu0 %v573
  %607 = vmatpush1.msra.mxu0 %v572
  %608 = vmatprep.subr.mxu0 %v571
  %609 = vmatpush1.msra.mxu0 %v570
  %610 = vmatprep.subr.mxu0 %v569
  %611 = vmatpush1.msra.mxu0 %v568
  %612 = vmatprep.subr.mxu0 %v567
  %613 = vmatpush1.msra.mxu0 %v566
  %614 = vmatprep.subr.mxu0 %v565
  %615 = vmatpush1.msra.mxu0 %v564
  %616 = vmatprep.subr.mxu0 0.0
  %617 = vmatpush2.msra.mxu0 0.0
  %618 = vmatprep.subr.mxu0 0.0
  %619 = vmatpush2.msra.mxu0 0.0
  %620 = vmatprep.subr.mxu0 0.0
  %621 = vmatpush2.msra.mxu0 0.0
  %622 = vmatprep.subr.mxu0 0.0
  %623 = vmatpush2.msra.mxu0 0.0
  %624 = vmatprep.subr.mxu0 0.0
  %625 = vmatpush2.msra.mxu0 0.0
  %626 = vmatprep.subr.mxu0 0.0
  %627 = vmatpush2.msra.mxu0 0.0
  %628 = vmatprep.subr.mxu0 0.0
  %629 = vmatpush2.msra.mxu0 0.0
  %630 = vmatprep.subr.mxu0 0.0
  %631 = vmatpush2.msra.mxu0 0.0
  %632 = vmatprep.subr.mxu0 0.0
  %633 = vmatpush2.msra.mxu0 0.0
  %634 = vmatprep.subr.mxu0 0.0
  %635 = vmatpush2.msra.mxu0 0.0
  %636 = vmatprep.subr.mxu0 0.0
  %637 = vmatpush2.msra.mxu0 0.0
  %638 = vmatprep.subr.mxu0 0.0
  %639 = vmatpush2.msra.mxu0 0.0
  %640 = vmatprep.subr.mxu0 0.0
  %641 = vmatpush2.msra.mxu0 0.0
  %642 = vmatprep.subr.mxu0 0.0
  %643 = vmatpush2.msra.mxu0 0.0
  %644 = vmatprep.subr.mxu0 0.0
  %645 = vmatpush2.msra.mxu0 0.0
  %646 = vmatprep.subr.mxu0 0.0
  %647 = vmatpush2.msra.mxu0 0.0
  %648 = vmatprep.mubr.f32.mxu0 0.0
  %649 = vmatmul.mubr.f32.gmra.mxu0 %v582
  %v650 = vpop.f32.mrf.mxu0
  %v651 = vadd.f32 0.0, %v650
  %v652 = vpop.f32.mrf.mxu0
  %v653 = vadd.f32 0.0, %v652
  %654 = vdwg.mxu0
  %v657 = vcombine.low %v651, %v653
  %v659 = vmul.f32 %v197, %v657
  %v660 = vmul.f32 %v198, %v657
  %v663 = vcombine.high %v659, %v659
  %v664 = vcombine.high %v660, %v660
  %v667 = vsel %vm206, %v659, 0.0
  %v668 = vsel %vm206, %v663, 0.0
  %v669 = vadd.f32 %v667, %v668
  %670 = vadd.xlane.f32.xlu0 %v669
  %v671 = vpop.xlane.xlu0 %670
  %v672 = vsel %vm206, %v660, 0.0
  %v673 = vsel %vm206, %v664, 0.0
  %v674 = vadd.f32 %v672, %v673
  %675 = vadd.xlane.f32.xlu0 %v674
  %v676 = vpop.xlane.xlu0 %675
  %v679 = vlaneseq
  %v680 = vand.u32 %v679, 127
  %v681 = vlaneseq
  %v682 = vshrl.u32 %v681, 7
  %v683 = vsub.s32 %v680, %v682
  %v684 = vrot.slane %v671, %v683
  %v685 = vlaneseq
  %v686 = vshrl.u32 %v685, 7
  %v687 = vsub.s32 %v680, %v686
  %v688 = vrot.slane %v676, %v687
  %vm689 = vcmask 1041409
  %v690 = vsel %vm689, %v688, %v684
  %vm692 = vcmask 25600
  %v693 = vsel %vm692, %v690, 0.0
  %694 = vadd.xlane.f32.xlu0 %v693
  %v695 = vpop.xlane.xlu0 %694
  %v696 = vld [vmem:[%s6] sm:$0x3]
  %v697 = vadd.f32 %v695, %v696
  %vm698 = vcmask 1024
  %699 = vst.msk [vmem:[%s7] sm:$0x3] %vm698, %v697
  %700 = vrot.lane.b32.xlu0 %v186, 64
  %v701 = vpop.permute.xlu0 %700
  %v702 = vsel %vm206, %v701, 0
  %704 = vmatprep.subr.mxu0 0.0
  %705 = vmatpush1.msra.mxu0 0.0
  %706 = vmatprep.subr.mxu0 0.0
  %707 = vmatpush1.msra.mxu0 0.0
  %708 = vmatprep.subr.mxu0 0.0
  %709 = vmatpush1.msra.mxu0 0.0
  %710 = vmatprep.subr.mxu0 0.0
  %711 = vmatpush1.msra.mxu0 0.0
  %712 = vmatprep.subr.mxu0 0.0
  %713 = vmatpush1.msra.mxu0 0.0
  %714 = vmatprep.subr.mxu0 0.0
  %715 = vmatpush1.msra.mxu0 0.0
  %716 = vmatprep.subr.mxu0 0.0
  %717 = vmatpush1.msra.mxu0 0.0
  %718 = vmatprep.subr.mxu0 0.0
  %719 = vmatpush1.msra.mxu0 0.0
  %720 = vmatprep.subr.mxu0 0.0
  %721 = vmatpush1.msra.mxu0 0.0
  %722 = vmatprep.subr.mxu0 0.0
  %723 = vmatpush1.msra.mxu0 0.0
  %724 = vmatprep.subr.mxu0 0.0
  %725 = vmatpush1.msra.mxu0 0.0
  %726 = vmatprep.subr.mxu0 0.0
  %727 = vmatpush1.msra.mxu0 0.0
  %728 = vmatprep.subr.mxu0 0.0
  %729 = vmatpush1.msra.mxu0 0.0
  %730 = vmatprep.subr.mxu0 0.0
  %731 = vmatpush1.msra.mxu0 0.0
  %732 = vmatprep.subr.mxu0 0.0
  %733 = vmatpush1.msra.mxu0 0.0
  %734 = vmatprep.subr.mxu0 0.0
  %735 = vmatpush1.msra.mxu0 %v702
  %736 = vmatprep.subr.mxu0 0.0
  %737 = vmatpush2.msra.mxu0 0.0
  %738 = vmatprep.subr.mxu0 0.0
  %739 = vmatpush2.msra.mxu0 0.0
  %740 = vmatprep.subr.mxu0 0.0
  %741 = vmatpush2.msra.mxu0 0.0
  %742 = vmatprep.subr.mxu0 0.0
  %743 = vmatpush2.msra.mxu0 0.0
  %744 = vmatprep.subr.mxu0 0.0
  %745 = vmatpush2.msra.mxu0 0.0
  %746 = vmatprep.subr.mxu0 0.0
  %747 = vmatpush2.msra.mxu0 0.0
  %748 = vmatprep.subr.mxu0 0.0
  %749 = vmatpush2.msra.mxu0 0.0
  %750 = vmatprep.subr.mxu0 0.0
  %751 = vmatpush2.msra.mxu0 0.0
  %752 = vmatprep.subr.mxu0 0.0
  %753 = vmatpush2.msra.mxu0 0.0
  %754 = vmatprep.subr.mxu0 0.0
  %755 = vmatpush2.msra.mxu0 0.0
  %756 = vmatprep.subr.mxu0 0.0
  %757 = vmatpush2.msra.mxu0 0.0
  %758 = vmatprep.subr.mxu0 0.0
  %759 = vmatpush2.msra.mxu0 0.0
  %760 = vmatprep.subr.mxu0 0.0
  %761 = vmatpush2.msra.mxu0 0.0
  %762 = vmatprep.subr.mxu0 0.0
  %763 = vmatpush2.msra.mxu0 0.0
  %764 = vmatprep.subr.mxu0 0.0
  %765 = vmatpush2.msra.mxu0 0.0
  %766 = vmatprep.subr.mxu0 0.0
  %767 = vmatpush2.msra.mxu0 0.0
  %768 = vmatprep.mubr.f32.mxu0 0.0
  %769 = vmatmul.mubr.f32.gmra.mxu0 %v201
  %v770 = vpop.f32.mrf.mxu0
  %v771 = vadd.f32 0.0, %v770
  %v772 = vpop.f32.mrf.mxu0
  %773 = vmatprep.mubr.f32.mxu0 0.0
  %774 = vmatmul.mubr.f32.gmra.mxu0 %v204
  %v775 = vpop.f32.mrf.mxu0
  %v776 = vadd.f32 0.0, %v775
  %v777 = vpop.f32.mrf.mxu0
  %778 = vdwg.mxu0
  %779 = vxpose.xlu0.b32.start [1/16] %v771, 128
  %780 = vxpose.xlu0.b32.cont [2/16] %v776, 128
  %781 = vxpose.xlu0.b32.cont [3/16] 0.0, 128
  %782 = vxpose.xlu0.b32.cont [4/16] 0.0, 128
  %783 = vxpose.xlu0.b32.cont [5/16] 0.0, 128
  %784 = vxpose.xlu0.b32.cont [6/16] 0.0, 128
  %785 = vxpose.xlu0.b32.cont [7/16] 0.0, 128
  %786 = vxpose.xlu0.b32.cont [8/16] 0.0, 128
  %787 = vxpose.xlu0.b32.cont [9/16] 0.0, 128
  %788 = vxpose.xlu0.b32.cont [10/16] 0.0, 128
  %789 = vxpose.xlu0.b32.cont [11/16] 0.0, 128
  %790 = vxpose.xlu0.b32.cont [12/16] 0.0, 128
  %791 = vxpose.xlu0.b32.cont [13/16] 0.0, 128
  %792 = vxpose.xlu0.b32.cont [14/16] 0.0, 128
  %793 = vxpose.xlu0.b32.cont [15/16] 0.0, 128
  %794 = vxpose.xlu0.b32.end [16/16] 0.0, 128
  %v795 = vpop.trf.xlu0
  %v796 = vpop.trf.xlu0
  %v797 = vpop.trf.xlu0
  %v798 = vpop.trf.xlu0
  %v799 = vpop.trf.xlu0
  %v800 = vpop.trf.xlu0
  %v801 = vpop.trf.xlu0
  %v802 = vpop.trf.xlu0
  %v803 = vpop.trf.xlu0
  %v804 = vpop.trf.xlu0
  %v805 = vpop.trf.xlu0
  %v806 = vpop.trf.xlu0
  %v807 = vpop.trf.xlu0
  %v808 = vpop.trf.xlu0
  %v809 = vpop.trf.xlu0
  %v810 = vpop.trf.xlu0
  %v812 = vsel %vm317, %v795, 0
  %v815 = vsel %vm317, %v796, 0
  %v818 = vsel %vm317, %v797, 0
  %v821 = vsel %vm317, %v798, 0
  %v824 = vsel %vm317, %v799, 0
  %v827 = vsel %vm317, %v800, 0
  %v830 = vsel %vm317, %v801, 0
  %v833 = vsel %vm317, %v802, 0
  %v836 = vsel %vm342, %v193, 0
  %v839 = vsel %vm342, %v194, 0
  %841 = vmatprep.subr.mxu0 0.0
  %842 = vmatpush1.msra.mxu0 0.0
  %843 = vmatprep.subr.mxu0 0.0
  %844 = vmatpush1.msra.mxu0 0.0
  %845 = vmatprep.subr.mxu0 0.0
  %846 = vmatpush1.msra.mxu0 0.0
  %847 = vmatprep.subr.mxu0 0.0
  %848 = vmatpush1.msra.mxu0 0.0
  %849 = vmatprep.subr.mxu0 0.0
  %850 = vmatpush1.msra.mxu0 0.0
  %851 = vmatprep.subr.mxu0 0.0
  %852 = vmatpush1.msra.mxu0 0.0
  %853 = vmatprep.subr.mxu0 0.0
  %854 = vmatpush1.msra.mxu0 0.0
  %855 = vmatprep.subr.mxu0 0.0
  %856 = vmatpush1.msra.mxu0 0.0
  %857 = vmatprep.subr.mxu0 0.0
  %858 = vmatpush1.msra.mxu0 0.0
  %859 = vmatprep.subr.mxu0 0.0
  %860 = vmatpush1.msra.mxu0 0.0
  %861 = vmatprep.subr.mxu0 0.0
  %862 = vmatpush1.msra.mxu0 0.0
  %863 = vmatprep.subr.mxu0 0.0
  %864 = vmatpush1.msra.mxu0 0.0
  %865 = vmatprep.subr.mxu0 0.0
  %866 = vmatpush1.msra.mxu0 0.0
  %867 = vmatprep.subr.mxu0 0.0
  %868 = vmatpush1.msra.mxu0 0.0
  %869 = vmatprep.subr.mxu0 %v839
  %870 = vmatpush1.msra.mxu0 %v836
  %871 = vmatprep.subr.mxu0 %v190
  %872 = vmatpush1.msra.mxu0 %v189
  %873 = vmatprep.subr.mxu0 0.0
  %874 = vmatpush2.msra.mxu0 0.0
  %875 = vmatprep.subr.mxu0 0.0
  %876 = vmatpush2.msra.mxu0 0.0
  %877 = vmatprep.subr.mxu0 0.0
  %878 = vmatpush2.msra.mxu0 0.0
  %879 = vmatprep.subr.mxu0 0.0
  %880 = vmatpush2.msra.mxu0 0.0
  %881 = vmatprep.subr.mxu0 0.0
  %882 = vmatpush2.msra.mxu0 0.0
  %883 = vmatprep.subr.mxu0 0.0
  %884 = vmatpush2.msra.mxu0 0.0
  %885 = vmatprep.subr.mxu0 0.0
  %886 = vmatpush2.msra.mxu0 0.0
  %887 = vmatprep.subr.mxu0 0.0
  %888 = vmatpush2.msra.mxu0 0.0
  %889 = vmatprep.subr.mxu0 0.0
  %890 = vmatpush2.msra.mxu0 0.0
  %891 = vmatprep.subr.mxu0 0.0
  %892 = vmatpush2.msra.mxu0 0.0
  %893 = vmatprep.subr.mxu0 0.0
  %894 = vmatpush2.msra.mxu0 0.0
  %895 = vmatprep.subr.mxu0 0.0
  %896 = vmatpush2.msra.mxu0 0.0
  %897 = vmatprep.subr.mxu0 0.0
  %898 = vmatpush2.msra.mxu0 0.0
  %899 = vmatprep.subr.mxu0 0.0
  %900 = vmatpush2.msra.mxu0 0.0
  %901 = vmatprep.subr.mxu0 0.0
  %902 = vmatpush2.msra.mxu0 0.0
  %903 = vmatprep.subr.mxu0 0.0
  %904 = vmatpush2.msra.mxu0 0.0
  %905 = vmatprep.mubr.f32.mxu0 0.0
  %906 = vmatmul.mubr.f32.gmra.mxu0 %v812
  %v907 = vpop.f32.mrf.mxu0
  %v908 = vadd.f32 0.0, %v907
  %v909 = vpop.f32.mrf.mxu0
  %v910 = vadd.f32 0.0, %v909
  %911 = vmatprep.mubr.f32.mxu0 0.0
  %912 = vmatmul.mubr.f32.gmra.mxu0 %v815
  %v913 = vpop.f32.mrf.mxu0
  %v914 = vadd.f32 0.0, %v913
  %v915 = vpop.f32.mrf.mxu0
  %v916 = vadd.f32 0.0, %v915
  %917 = vmatprep.mubr.f32.mxu0 0.0
  %918 = vmatmul.mubr.f32.gmra.mxu0 %v818
  %v919 = vpop.f32.mrf.mxu0
  %v920 = vadd.f32 0.0, %v919
  %v921 = vpop.f32.mrf.mxu0
  %v922 = vadd.f32 0.0, %v921
  %923 = vmatprep.mubr.f32.mxu0 0.0
  %924 = vmatmul.mubr.f32.gmra.mxu0 %v821
  %v925 = vpop.f32.mrf.mxu0
  %v926 = vadd.f32 0.0, %v925
  %v927 = vpop.f32.mrf.mxu0
  %v928 = vadd.f32 0.0, %v927
  %929 = vmatprep.mubr.f32.mxu0 0.0
  %930 = vmatmul.mubr.f32.gmra.mxu0 %v824
  %v931 = vpop.f32.mrf.mxu0
  %v932 = vadd.f32 0.0, %v931
  %v933 = vpop.f32.mrf.mxu0
  %v934 = vadd.f32 0.0, %v933
  %935 = vmatprep.mubr.f32.mxu0 0.0
  %936 = vmatmul.mubr.f32.gmra.mxu0 %v827
  %v937 = vpop.f32.mrf.mxu0
  %v938 = vadd.f32 0.0, %v937
  %v939 = vpop.f32.mrf.mxu0
  %v940 = vadd.f32 0.0, %v939
  %941 = vmatprep.mubr.f32.mxu0 0.0
  %942 = vmatmul.mubr.f32.gmra.mxu0 %v830
  %v943 = vpop.f32.mrf.mxu0
  %v944 = vadd.f32 0.0, %v943
  %v945 = vpop.f32.mrf.mxu0
  %v946 = vadd.f32 0.0, %v945
  %947 = vmatprep.mubr.f32.mxu0 0.0
  %948 = vmatmul.mubr.f32.gmra.mxu0 %v833
  %v949 = vpop.f32.mrf.mxu0
  %v950 = vadd.f32 0.0, %v949
  %v951 = vpop.f32.mrf.mxu0
  %v952 = vadd.f32 0.0, %v951
  %953 = vdwg.mxu0
  %v954 = vmax.f32 %v908, %v920
  %v955 = vmax.f32 %v914, %v926
  %v956 = vmax.f32 %v954, %v932
  %v957 = vmax.f32 %v955, %v938
  %v958 = vmax.f32 %v956, %v944
  %v959 = vmax.f32 %v957, %v950
  %v960 = vmax.f32 %v958, %v959
  %v961 = vrot.slane %v960, 4
  %v962 = vmax.f32 %v960, %v961
  %v963 = vrot.slane %v962, 2
  %v964 = vmax.f32 %v962, %v963
  %v965 = vrot.slane %v964, 1
  %v966 = vmax.f32 %v964, %v965
  %v967 = vmax.f32 %v910, %v922
  %v968 = vmax.f32 %v916, %v928
  %v969 = vmax.f32 %v967, %v934
  %v970 = vmax.f32 %v968, %v940
  %v971 = vmax.f32 %v969, %v946
  %v972 = vmax.f32 %v970, %v952
  %v973 = vmax.f32 %v971, %v972
  %v974 = vrot.slane %v973, 4
  %v975 = vmax.f32 %v973, %v974
  %v976 = vrot.slane %v975, 2
  %v977 = vmax.f32 %v975, %v976
  %v978 = vrot.slane %v977, 1
  %v979 = vmax.f32 %v977, %v978
  %v980 = vsub.f32 %v908, %v966
  %v981 = vsub.f32 %v910, %v979
  %v982 = vsub.f32 %v914, %v966
  %v983 = vsub.f32 %v916, %v979
  %v984 = vsub.f32 %v920, %v966
  %v985 = vsub.f32 %v922, %v979
  %v986 = vsub.f32 %v926, %v966
  %v987 = vsub.f32 %v928, %v979
  %v988 = vsub.f32 %v932, %v966
  %v989 = vsub.f32 %v934, %v979
  %v990 = vsub.f32 %v938, %v966
  %v991 = vsub.f32 %v940, %v979
  %v992 = vsub.f32 %v944, %v966
  %v993 = vsub.f32 %v946, %v979
  %v994 = vsub.f32 %v950, %v966
  %v995 = vsub.f32 %v952, %v979
  %v996 = vmul.f32 %v980, 1.442695
  %v997 = vpow.pop %v996
  %v998 = vmul.f32 %v981, 1.442695
  %v999 = vpow.pop %v998
  %v1000 = vmul.f32 %v982, 1.442695
  %v1001 = vpow.pop %v1000
  %v1002 = vmul.f32 %v983, 1.442695
  %v1003 = vpow.pop %v1002
  %v1004 = vmul.f32 %v984, 1.442695
  %v1005 = vpow.pop %v1004
  %v1006 = vmul.f32 %v985, 1.442695
  %v1007 = vpow.pop %v1006
  %v1008 = vmul.f32 %v986, 1.442695
  %v1009 = vpow.pop %v1008
  %v1010 = vmul.f32 %v987, 1.442695
  %v1011 = vpow.pop %v1010
  %v1012 = vmul.f32 %v988, 1.442695
  %v1013 = vpow.pop %v1012
  %v1014 = vmul.f32 %v989, 1.442695
  %v1015 = vpow.pop %v1014
  %v1016 = vmul.f32 %v990, 1.442695
  %v1017 = vpow.pop %v1016
  %v1018 = vmul.f32 %v991, 1.442695
  %v1019 = vpow.pop %v1018
  %v1020 = vmul.f32 %v992, 1.442695
  %v1021 = vpow.pop %v1020
  %v1022 = vmul.f32 %v993, 1.442695
  %v1023 = vpow.pop %v1022
  %v1024 = vmul.f32 %v994, 1.442695
  %v1025 = vpow.pop %v1024
  %v1026 = vmul.f32 %v995, 1.442695
  %v1027 = vpow.pop %v1026
  %v1028 = vadd.f32 %v997, %v1001
  %v1029 = vadd.f32 %v1028, %v1005
  %v1030 = vadd.f32 %v1029, %v1009
  %v1031 = vadd.f32 %v1030, %v1013
  %v1032 = vadd.f32 %v1031, %v1017
  %v1033 = vadd.f32 %v1032, %v1021
  %v1034 = vadd.f32 %v1033, %v1025
  %v1035 = vrot.slane %v1034, 4
  %v1036 = vadd.f32 %v1034, %v1035
  %v1037 = vrot.slane %v1036, 2
  %v1038 = vadd.f32 %v1036, %v1037
  %v1039 = vrot.slane %v1038, 1
  %v1040 = vadd.f32 %v1038, %v1039
  %v1041 = vadd.f32 %v999, %v1003
  %v1042 = vadd.f32 %v1041, %v1007
  %v1043 = vadd.f32 %v1042, %v1011
  %v1044 = vadd.f32 %v1043, %v1015
  %v1045 = vadd.f32 %v1044, %v1019
  %v1046 = vadd.f32 %v1045, %v1023
  %v1047 = vadd.f32 %v1046, %v1027
  %v1048 = vrot.slane %v1047, 4
  %v1049 = vadd.f32 %v1047, %v1048
  %v1050 = vrot.slane %v1049, 2
  %v1051 = vadd.f32 %v1049, %v1050
  %v1052 = vrot.slane %v1051, 1
  %v1053 = vadd.f32 %v1051, %v1052
  %v1054 = vrcp.pop %v1040
  %v1055 = vrcp.pop %v1053
  %v1056 = vmul.f32 %v997, %v1054
  %v1057 = vmul.f32 %v999, %v1055
  %v1058 = vmul.f32 %v1001, %v1054
  %v1059 = vmul.f32 %v1003, %v1055
  %v1060 = vmul.f32 %v1005, %v1054
  %v1061 = vmul.f32 %v1007, %v1055
  %v1062 = vmul.f32 %v1009, %v1054
  %v1063 = vmul.f32 %v1011, %v1055
  %v1064 = vmul.f32 %v1013, %v1054
  %v1065 = vmul.f32 %v1015, %v1055
  %v1066 = vmul.f32 %v1017, %v1054
  %v1067 = vmul.f32 %v1019, %v1055
  %v1068 = vmul.f32 %v1021, %v1054
  %v1069 = vmul.f32 %v1023, %v1055
  %v1070 = vmul.f32 %v1025, %v1054
  %v1071 = vmul.f32 %v1027, %v1055
  %1072 = vrot.lane.b32.xlu0 %v580, 64
  %v1073 = vpop.permute.xlu0 %1072
  %v1074 = vsel %vm581, %v1073, 0
  %1076 = vmatprep.subr.mxu0 0.0
  %1077 = vmatpush1.msra.mxu0 0.0
  %1078 = vmatprep.subr.mxu0 0.0
  %1079 = vmatpush1.msra.mxu0 0.0
  %1080 = vmatprep.subr.mxu0 0.0
  %1081 = vmatpush1.msra.mxu0 0.0
  %1082 = vmatprep.subr.mxu0 0.0
  %1083 = vmatpush1.msra.mxu0 0.0
  %1084 = vmatprep.subr.mxu0 0.0
  %1085 = vmatpush1.msra.mxu0 0.0
  %1086 = vmatprep.subr.mxu0 0.0
  %1087 = vmatpush1.msra.mxu0 0.0
  %1088 = vmatprep.subr.mxu0 0.0
  %1089 = vmatpush1.msra.mxu0 0.0
  %1090 = vmatprep.subr.mxu0 0.0
  %1091 = vmatpush1.msra.mxu0 0.0
  %1092 = vmatprep.subr.mxu0 %v1071
  %1093 = vmatpush1.msra.mxu0 %v1070
  %1094 = vmatprep.subr.mxu0 %v1069
  %1095 = vmatpush1.msra.mxu0 %v1068
  %1096 = vmatprep.subr.mxu0 %v1067
  %1097 = vmatpush1.msra.mxu0 %v1066
  %1098 = vmatprep.subr.mxu0 %v1065
  %1099 = vmatpush1.msra.mxu0 %v1064
  %1100 = vmatprep.subr.mxu0 %v1063
  %1101 = vmatpush1.msra.mxu0 %v1062
  %1102 = vmatprep.subr.mxu0 %v1061
  %1103 = vmatpush1.msra.mxu0 %v1060
  %1104 = vmatprep.subr.mxu0 %v1059
  %1105 = vmatpush1.msra.mxu0 %v1058
  %1106 = vmatprep.subr.mxu0 %v1057
  %1107 = vmatpush1.msra.mxu0 %v1056
  %1108 = vmatprep.subr.mxu0 0.0
  %1109 = vmatpush2.msra.mxu0 0.0
  %1110 = vmatprep.subr.mxu0 0.0
  %1111 = vmatpush2.msra.mxu0 0.0
  %1112 = vmatprep.subr.mxu0 0.0
  %1113 = vmatpush2.msra.mxu0 0.0
  %1114 = vmatprep.subr.mxu0 0.0
  %1115 = vmatpush2.msra.mxu0 0.0
  %1116 = vmatprep.subr.mxu0 0.0
  %1117 = vmatpush2.msra.mxu0 0.0
  %1118 = vmatprep.subr.mxu0 0.0
  %1119 = vmatpush2.msra.mxu0 0.0
  %1120 = vmatprep.subr.mxu0 0.0
  %1121 = vmatpush2.msra.mxu0 0.0
  %1122 = vmatprep.subr.mxu0 0.0
  %1123 = vmatpush2.msra.mxu0 0.0
  %1124 = vmatprep.subr.mxu0 0.0
  %1125 = vmatpush2.msra.mxu0 0.0
  %1126 = vmatprep.subr.mxu0 0.0
  %1127 = vmatpush2.msra.mxu0 0.0
  %1128 = vmatprep.subr.mxu0 0.0
  %1129 = vmatpush2.msra.mxu0 0.0
  %1130 = vmatprep.subr.mxu0 0.0
  %1131 = vmatpush2.msra.mxu0 0.0
  %1132 = vmatprep.subr.mxu0 0.0
  %1133 = vmatpush2.msra.mxu0 0.0
  %1134 = vmatprep.subr.mxu0 0.0
  %1135 = vmatpush2.msra.mxu0 0.0
  %1136 = vmatprep.subr.mxu0 0.0
  %1137 = vmatpush2.msra.mxu0 0.0
  %1138 = vmatprep.subr.mxu0 0.0
  %1139 = vmatpush2.msra.mxu0 0.0
  %1140 = vmatprep.mubr.f32.mxu0 0.0
  %1141 = vmatmul.mubr.f32.gmra.mxu0 %v1074
  %v1142 = vpop.f32.mrf.mxu0
  %v1143 = vadd.f32 0.0, %v1142
  %v1144 = vpop.f32.mrf.mxu0
  %v1145 = vadd.f32 0.0, %v1144
  %1146 = vdwg.mxu0
  %v1149 = vcombine.low %v1143, %v1145
  %v1151 = vmul.f32 %v197, %v1149
  %v1152 = vmul.f32 %v198, %v1149
  %v1155 = vcombine.high %v1151, %v1151
  %v1156 = vcombine.high %v1152, %v1152
  %v1159 = vsel %vm206, %v1151, 0.0
  %v1160 = vsel %vm206, %v1155, 0.0
  %v1161 = vadd.f32 %v1159, %v1160
  %1162 = vadd.xlane.f32.xlu0 %v1161
  %v1163 = vpop.xlane.xlu0 %1162
  %v1164 = vsel %vm206, %v1152, 0.0
  %v1165 = vsel %vm206, %v1156, 0.0
  %v1166 = vadd.f32 %v1164, %v1165
  %1167 = vadd.xlane.f32.xlu0 %v1166
  %v1168 = vpop.xlane.xlu0 %1167
  %v1171 = vlaneseq
  %v1172 = vshrl.u32 %v1171, 7
  %v1173 = vsub.s32 %v680, %v1172
  %v1174 = vrot.slane %v1163, %v1173
  %v1175 = vlaneseq
  %v1176 = vshrl.u32 %v1175, 7
  %v1177 = vsub.s32 %v680, %v1176
  %v1178 = vrot.slane %v1168, %v1177
  %v1179 = vsel %vm689, %v1178, %v1174
  %v1181 = vsel %vm692, %v1179, 0.0
  %1182 = vadd.xlane.f32.xlu0 %v1181
  %v1183 = vpop.xlane.xlu0 %1182
  %v1184 = vld [vmem:[%s6] sm:$0x3]
  %v1185 = vadd.f32 %v1183, %v1184
  %1187 = vrot.lane.b32.xlu0 %v1185, 1
  %v1188 = vpop.permute.xlu0 %1187
  %vm1190 = vcmask 9224
  %1191 = vst.msk [vmem:[%s7] sm:$0x3] %vm1190, %v1188
  // Predicated region
  $region30: #{nonlocal_net_forward.1} parent=0 // pred_check
    _
  $region31: #{nonlocal_net_forward.1} parent=0 // pred_check_branch
    %1193 = sbr.rel (0) target = $region33
  $region32: #{nonlocal_net_forward.1} parent=0 // pred_region
    _
  $region33: #{nonlocal_net_forward.1} parent=0 // pred_fallthru
    _
  // Predicated region
  $region34: #{nonlocal_net_forward.1} parent=0 // pred_check
    _
  $region35: #{nonlocal_net_forward.1} parent=0 // pred_check_branch
    %1195 = sbr.rel (0) target = $region37
  $region36: #{nonlocal_net_forward.1} parent=0 // pred_region
    _
  $region37: #{nonlocal_net_forward.1} parent=0 // pred_fallthru
    _

</llo_original>
